<compile_context>
chip_gen: v5e
topology: v5e:2x2
jax: 0.10.0
libtpu: 0.0.40
codegen_flags: <defaults>
</compile_context>

<pallas_src>
import functools

import jax
import jax.numpy as jnp
from jax.experimental import pallas as pl
from jax.experimental.pallas import tpu as pltpu


def _round_up(x: int, m: int) -> int:
    return ((x + m - 1) // m) * m


def _pick_ff_tile(d_ff: int, tf: int) -> int:
    """Largest multiple of 128 that divides d_ff and is <= tf; else full d_ff."""
    best = None
    t = 128
    while t <= min(tf, d_ff):
        if d_ff % t == 0:
            best = t
        t += 128
    return best if best is not None else d_ff


def _ffn_kernel(x_ref, w1_ref, b1_ref, w2_ref, b2_ref, o_ref, acc_ref):
    """One (row-tile, d_ff-chunk) step of  y = relu(x @ W1^T + b1) @ W2^T + b2."""
    k = pl.program_id(1)

    @pl.when(k == 0)
    def _init():
        acc_ref[...] = jnp.zeros_like(acc_ref)

    # First matmul on the MXU: native-dtype operands, f32 accumulation.
    h = jnp.dot(x_ref[...], w1_ref[...], preferred_element_type=jnp.float32)
    # Bias + ReLU in f32 on the VPU (exact per-chunk: elementwise over d_ff).
    h = jnp.maximum(h + b1_ref[...].astype(jnp.float32), 0.0)

    # Second matmul: accumulate this d_ff chunk's contribution (f32 accumulator).
    acc_ref[...] += jnp.dot(h.astype(w2_ref.dtype), w2_ref[...],
                            preferred_element_type=jnp.float32)

    @pl.when(k == pl.num_programs(1) - 1)
    def _finalize():
        o_ref[...] = (acc_ref[...] + b2_ref[...].astype(jnp.float32)).astype(o_ref.dtype)


def _ffn_2d(x2, w1_t, b1_2, w2_t, b2_2, *, tm, tf):
    """FFN on a 2-D slab x2: (M, d_model).  Weights already transposed."""
    M, d_model = x2.shape
    d_ff = w1_t.shape[1]

    # Clamp tiles to the problem (row tile a multiple of 8 sublanes; d_ff tile
    # a multiple of 128 lanes that divides d_ff, or full d_ff).
    tm_eff = min(tm, _round_up(M, 8))
    tf_eff = _pick_ff_tile(d_ff, tf)

    # Pad rows so the grid covers them exactly; padded rows sliced off below.
    M_pad = _round_up(M, tm_eff)
    if M_pad != M:
        x2 = jnp.pad(x2, ((0, M_pad - M), (0, 0)))

    grid = (M_pad // tm_eff, d_ff // tf_eff)

    x_isz = jnp.dtype(x2.dtype).itemsize
    w_isz = jnp.dtype(w1_t.dtype).itemsize

    # Rough double-buffered working-set estimate for the scoped-VMEM limit.
    est = 2 * (tm_eff * d_model * x_isz            # x row tile
               + d_model * tf_eff * w_isz          # W1^T chunk
               + tf_eff * d_model * w_isz          # W2^T chunk
               + (tf_eff + d_model) * w_isz        # biases
               + tm_eff * d_model * x_isz)         # out tile
    est += tm_eff * d_model * 4                    # f32 accumulator
    est += tm_eff * tf_eff * 4                     # h intermediate
    vmem_limit = max(32 * 1024 * 1024, int(1.5 * est))

    cost = pl.CostEstimate(
        flops=2 * 2 * M * d_model * d_ff,          # two matmuls
        transcendentals=0,
        bytes_accessed=(x2.size * x_isz + w1_t.size * w_isz + w2_t.size * w_isz
                        + b1_2.size * w_isz + b2_2.size * w_isz
                        + M_pad * d_model * x_isz),
    )

    out = pl.pallas_call(
        _ffn_kernel,
        out_shape=jax.ShapeDtypeStruct((M_pad, d_model), x2.dtype),
        grid_spec=pltpu.PrefetchScalarGridSpec(
            num_scalar_prefetch=0,
            grid=grid,
            in_specs=[
                pl.BlockSpec((tm_eff, d_model), lambda i, k: (i, 0)),   # x row tile
                pl.BlockSpec((d_model, tf_eff), lambda i, k: (0, k)),   # W1^T chunk
                pl.BlockSpec((1, tf_eff), lambda i, k: (0, k)),         # b1 chunk
                pl.BlockSpec((tf_eff, d_model), lambda i, k: (k, 0)),   # W2^T chunk
                pl.BlockSpec((1, d_model), lambda i, k: (0, 0)),        # b2 (resident)
            ],
            out_specs=pl.BlockSpec((tm_eff, d_model), lambda i, k: (i, 0)),  # ignores k
            scratch_shapes=[pltpu.VMEM((tm_eff, d_model), jnp.float32)],
        ),
        compiler_params=pltpu.CompilerParams(
            dimension_semantics=("parallel", "arbitrary"),
            vmem_limit_bytes=vmem_limit,
        ),
        cost_estimate=cost,
    )(x2, w1_t, b1_2, w2_t, b2_2)

    return out[:M]


@functools.partial(jax.jit, static_argnames=("tm", "tf"))
def position_wise_feed_forward(x, w1, b1, w2, b2, *, tm=512, tf=512):
    """x: (B, S, d_model); weights in PyTorch nn.Linear layout:
       w1: (d_ff, d_model), b1: (d_ff,), w2: (d_model, d_ff), b2: (d_model,)."""
    B, S, d_model = x.shape
    # One-time layout prep fused under this jit.  For production, cache the
    # pre-transposed weights instead of transposing every call.
    w1_t = w1.T                      # (d_model, d_ff)
    w2_t = w2.T                      # (d_ff, d_model)
    b1_2 = b1.reshape(1, -1)         # (1, d_ff)
    b2_2 = b2.reshape(1, -1)         # (1, d_model)
    y2 = _ffn_2d(x.reshape(B * S, d_model), w1_t, b1_2, w2_t, b2_2, tm=tm, tf=tf)
    return y2.reshape(B, S, d_model)


if __name__ == "__main__":
    # Small but MXU/lane-friendly shapes (d_model multiple of 128).
    B, S, d_model, d_ff = 2, 8, 128, 256

    key = jax.random.PRNGKey(0)
    kx, kw1, kb1, kw2, kb2 = jax.random.split(key, 5)

    x = jax.random.normal(kx, (B, S, d_model), dtype=jnp.float32)
    bound1 = 1.0 / (d_model ** 0.5)
    bound2 = 1.0 / (d_ff ** 0.5)
    w1 = jax.random.uniform(kw1, (d_ff, d_model), jnp.float32, -bound1, bound1)
    b1 = jax.random.uniform(kb1, (d_ff,), jnp.float32, -bound1, bound1)
    w2 = jax.random.uniform(kw2, (d_model, d_ff), jnp.float32, -bound2, bound2)
    b2 = jax.random.uniform(kb2, (d_model,), jnp.float32, -bound2, bound2)

    y = position_wise_feed_forward(x, w1, b1, w2, b2)
    y = jax.block_until_ready(y)

    # Pure-JAX reference of the exact PyTorch semantics.
    h_ref = jnp.maximum(x @ w1.T + b1, 0.0)
    y_ref = h_ref @ w2.T + b2
    assert y.shape == (B, S, d_model)
    assert jnp.allclose(y, y_ref, atol=1e-4, rtol=1e-4), "mismatch vs reference"

    print("KERNEL_OK")
</pallas_src>

<mosaic_0001>
module attributes {stable_mosaic.version = 11 : i64} {
  func.func @_ffn_kernel(%arg0: i32, %arg1: i32, %arg2: memref<16x128xf32, #tpu.memory_space<vmem>>, %arg3: memref<128x256xf32, #tpu.memory_space<vmem>>, %arg4: memref<1x256xf32, #tpu.memory_space<vmem>>, %arg5: memref<256x128xf32, #tpu.memory_space<vmem>>, %arg6: memref<1x128xf32, #tpu.memory_space<vmem>>, %arg7: memref<16x128xf32, #tpu.memory_space<vmem>>, %arg8: memref<16x128xf32, #tpu.memory_space<vmem>>) attributes {dimension_semantics = [#tpu.dimension_semantics<parallel>, #tpu.dimension_semantics<arbitrary>], iteration_bounds = array<i64: 1, 1>, scalar_prefetch = 0 : i64, scratch_operands = 1 : i64, tpu.core_type = #tpu.core_type<tc>, window_params = [{transform_indices = @transform_0, window_bounds = array<i64: 16, 128>}, {transform_indices = @transform_1, window_bounds = array<i64: 128, 256>}, {transform_indices = @transform_2, window_bounds = array<i64: 1, 256>}, {transform_indices = @transform_3, window_bounds = array<i64: 256, 128>}, {pipeline_mode = #tpu.pipeline_mode<synchronous>, transform_indices = @transform_4, window_bounds = array<i64: 1, 128>}, {transform_indices = @transform_5, window_bounds = array<i64: 16, 128>}]} {
    %c0_i32 = arith.constant 0 : i32
    %0 = arith.cmpi eq, %arg1, %c0_i32 : i32
    %1 = arith.extui %0 : i1 to i32
    %c0_i32_0 = arith.constant 0 : i32
    %2 = arith.cmpi ne, %1, %c0_i32_0 : i32
    scf.if %2 {
      %cst_16 = arith.constant 0.000000e+00 : f32
      %19 = vector.broadcast %cst_16 : f32 to vector<16x128xf32>
      %c0_17 = arith.constant 0 : index
      %c0_18 = arith.constant 0 : index
      %20 = vector.load %arg8[%c0_17, %c0_18] : memref<16x128xf32, #tpu.memory_space<vmem>>, vector<16x128xf32>
      tpu.vector_store %arg8[%c0_17, %c0_18], %19 {strides = array<i32>} : memref<16x128xf32, #tpu.memory_space<vmem>>, vector<16x128xf32>,
    } else {
    }
    %c0 = arith.constant 0 : index
    %c0_1 = arith.constant 0 : index
    %3 = vector.load %arg2[%c0, %c0_1] : memref<16x128xf32, #tpu.memory_space<vmem>>, vector<16x128xf32>
    %c0_2 = arith.constant 0 : index
    %c0_3 = arith.constant 0 : index
    %4 = vector.load %arg3[%c0_2, %c0_3] : memref<128x256xf32, #tpu.memory_space<vmem>>, vector<128x256xf32>
    %cst = arith.constant dense<0.000000e+00> : vector<16x256xf32>
    %5 = tpu.matmul %3, %4, %cst {dimension_numbers = #tpu.dot_dimension_numbers<[1], [0], [0], [1], [0, 0, 1, 1], [], []>} : vector<16x128xf32>, vector<128x256xf32>, vector<16x256xf32> -> vector<16x256xf32>
    %c0_4 = arith.constant 0 : index
    %c0_5 = arith.constant 0 : index
    %6 = vector.load %arg4[%c0_4, %c0_5] : memref<1x256xf32, #tpu.memory_space<vmem>>, vector<1x256xf32>
    %7 = vector.broadcast %6 : vector<1x256xf32> to vector<16x256xf32>
    %8 = arith.addf %5, %7 : vector<16x256xf32>
    %cst_6 = arith.constant 0.000000e+00 : f32
    %9 = vector.broadcast %cst_6 : f32 to vector<16x256xf32>
    %10 = arith.maximumf %8, %9 : vector<16x256xf32>
    %c0_7 = arith.constant 0 : index
    %c0_8 = arith.constant 0 : index
    %11 = vector.load %arg8[%c0_7, %c0_8] : memref<16x128xf32, #tpu.memory_space<vmem>>, vector<16x128xf32>
    %c0_9 = arith.constant 0 : index
    %c0_10 = arith.constant 0 : index
    %12 = vector.load %arg5[%c0_9, %c0_10] : memref<256x128xf32, #tpu.memory_space<vmem>>, vector<256x128xf32>
    %cst_11 = arith.constant dense<0.000000e+00> : vector<16x128xf32>
    %13 = tpu.matmul %10, %12, %cst_11 {dimension_numbers = #tpu.dot_dimension_numbers<[1], [0], [0], [1], [0, 0, 1, 1], [], []>} : vector<16x256xf32>, vector<256x128xf32>, vector<16x128xf32> -> vector<16x128xf32>
    %14 = arith.addf %11, %13 : vector<16x128xf32>
    %c0_12 = arith.constant 0 : index
    %c0_13 = arith.constant 0 : index
    %15 = vector.load %arg8[%c0_12, %c0_13] : memref<16x128xf32, #tpu.memory_space<vmem>>, vector<16x128xf32>
    tpu.vector_store %arg8[%c0_12, %c0_13], %14 {strides = array<i32>} : memref<16x128xf32, #tpu.memory_space<vmem>>, vector<16x128xf32>,
    %c0_i32_14 = arith.constant 0 : i32
    %16 = arith.cmpi eq, %arg1, %c0_i32_14 : i32
    %17 = arith.extui %16 : i1 to i32
    %c0_i32_15 = arith.constant 0 : i32
    %18 = arith.cmpi ne, %17, %c0_i32_15 : i32
    scf.if %18 {
      %c0_16 = arith.constant 0 : index
      %c0_17 = arith.constant 0 : index
      %19 = vector.load %arg8[%c0_16, %c0_17] : memref<16x128xf32, #tpu.memory_space<vmem>>, vector<16x128xf32>
      %c0_18 = arith.constant 0 : index
      %c0_19 = arith.constant 0 : index
      %20 = vector.load %arg6[%c0_18, %c0_19] : memref<1x128xf32, #tpu.memory_space<vmem>>, vector<1x128xf32>
      %21 = vector.broadcast %20 : vector<1x128xf32> to vector<16x128xf32>
      %22 = arith.addf %19, %21 : vector<16x128xf32>
      %c0_20 = arith.constant 0 : index
      %c0_21 = arith.constant 0 : index
      %23 = vector.load %arg7[%c0_20, %c0_21] : memref<16x128xf32, #tpu.memory_space<vmem>>, vector<16x128xf32>
      tpu.vector_store %arg7[%c0_20, %c0_21], %22 {strides = array<i32>} : memref<16x128xf32, #tpu.memory_space<vmem>>, vector<16x128xf32>,
    } else {
    }
    return
  }
  func.func @transform_0(%arg0: i32, %arg1: i32) -> (i32, i32) {
    %c0_i32 = arith.constant 0 : i32
    %c0_i32_0 = arith.constant 0 : i32
    return %arg0, %c0_i32 : i32, i32
  }
  func.func @transform_1(%arg0: i32, %arg1: i32) -> (i32, i32) {
    %c0_i32 = arith.constant 0 : i32
    %c0_i32_0 = arith.constant 0 : i32
    return %c0_i32, %arg1 : i32, i32
  }
  func.func @transform_2(%arg0: i32, %arg1: i32) -> (i32, i32) {
    %c0_i32 = arith.constant 0 : i32
    %c0_i32_0 = arith.constant 0 : i32
    return %c0_i32, %arg1 : i32, i32
  }
  func.func @transform_3(%arg0: i32, %arg1: i32) -> (i32, i32) {
    %c0_i32 = arith.constant 0 : i32
    %c0_i32_0 = arith.constant 0 : i32
    return %arg1, %c0_i32 : i32, i32
  }
  func.func @transform_4(%arg0: i32, %arg1: i32) -> (i32, i32) {
    %c0_i32 = arith.constant 0 : i32
    %c0_i32_0 = arith.constant 0 : i32
    %c0_i32_1 = arith.constant 0 : i32
    return %c0_i32, %c0_i32_0 : i32, i32
  }
  func.func @transform_5(%arg0: i32, %arg1: i32) -> (i32, i32) {
    %c0_i32 = arith.constant 0 : i32
    %c0_i32_0 = arith.constant 0 : i32
    return %arg0, %c0_i32 : i32, i32
  }
}

</mosaic_0001>

<llo_original>
// kernel: position_wise_feed_forward.1
$region0: #{position_wise_feed_forward.1}
  #allocation0 [shape = 'u32[]', space=smem, size = 0x4, offset = 0x4, fixed_abs, tag = 'smem constant byte address 0x4 - core index']
  #allocation1 [shape = 'u32[72,128]{1,0:T(1,128)}', space=vmem, size = 0x9000, scoped, tag = 'internal scratch']
  #allocation2 [shape = 'f32[16,128]{1,0:T(8,128)}', space=vmem, size = 0x2000, scoped, tag = 'scratch operand']
  %s0 = inlined_call_operand.vmem [shape: f32[16,128], index: 0, kind: input, shape index: {}]
  %s1 = inlined_call_operand.vmem [shape: f32[128,256], index: 1, kind: input, shape index: {}]
  %s2 = inlined_call_operand.vmem [shape: f32[1,256], index: 2, kind: input, shape index: {}]
  %s3 = inlined_call_operand.vmem [shape: f32[256,128], index: 3, kind: input, shape index: {}]
  %s4 = inlined_call_operand.vmem [shape: f32[1,128], index: 4, kind: input, shape index: {}]
  %s5 = inlined_call_operand.hbm [shape: f32[16,128], index: 5, kind: output, shape index: {}]
  %s6 = sld [smem:[#allocation0]]
  $region38: #{position_wise_feed_forward.1} parent=0
    _
  %s8 = ssub.s32 1, %s6
  %s9 = scalar_select 0, %s8, %s6
  $region1: #{position_wise_feed_forward.1} parent=0
    #allocation3 [shape = 'u8[8192]{0}', space=vmem, size = 0x2000, scoped, tag = 'output window, operand 0, single buffered']
    #allocation4 [shape = 's32[1]{0}', space=sflag, size = 0x4, scoped, tag = 'scoped memory for position_wise_feed_forward.1']
    %10 = vsyncpa [#allocation4], 0
    // Predicated region
    $region2: #{position_wise_feed_forward.1} parent=1 // pred_check
      _
    $region3: #{position_wise_feed_forward.1} parent=1 // pred_check_branch
      %12 = sbr.rel (0) target = $region5
    $region4: #{position_wise_feed_forward.1} parent=1 // pred_region
      _
    $region5: #{position_wise_feed_forward.1} parent=1 // pred_fallthru
      _
    // Predicated region
    $region6: #{position_wise_feed_forward.1} parent=1 // pred_check
      _
    $region7: #{position_wise_feed_forward.1} parent=1 // pred_check_branch
      %14 = sbr.rel (0) target = $region9
    $region8: #{position_wise_feed_forward.1} parent=1 // pred_region
      _
    $region9: #{position_wise_feed_forward.1} parent=1 // pred_fallthru
      _
    // Predicated region
    $region10: #{position_wise_feed_forward.1} parent=1 // pred_check
      _
    $region11: #{position_wise_feed_forward.1} parent=1 // pred_check_branch
      %16 = sbr.rel (0) target = $region13
    $region12: #{position_wise_feed_forward.1} parent=1 // pred_region
      _
    $region13: #{position_wise_feed_forward.1} parent=1 // pred_fallthru
      _
    // Predicated region
    $region14: #{position_wise_feed_forward.1} parent=1 // pred_check
      _
    $region15: #{position_wise_feed_forward.1} parent=1 // pred_check_branch
      %18 = sbr.rel (0) target = $region17
    $region16: #{position_wise_feed_forward.1} parent=1 // pred_region
      _
    $region17: #{position_wise_feed_forward.1} parent=1 // pred_fallthru
      _
    // Predicated region
    $region18: #{position_wise_feed_forward.1} parent=1 // pred_check
      _
    $region19: #{position_wise_feed_forward.1} parent=1 // pred_check_branch
      %20 = sbr.rel (0) target = $region21
    $region20: #{position_wise_feed_forward.1} parent=1 // pred_region
      _
    $region21: #{position_wise_feed_forward.1} parent=1 // pred_fallthru
      _
    %p21 = scmp.eq.s32.totalorder 0, 0
    // Predicated region
    $region22: #{position_wise_feed_forward.1} parent=1 // pred_check
      %p22 = pneg %p21
    $region23: #{position_wise_feed_forward.1} parent=1 // pred_check_branch
      %24 = sbr.rel (%p22) target = $region25
    $region24: #{position_wise_feed_forward.1} parent=1 // pred_region
      %25 = vst [vmem:[#allocation2] sm:$0xff] 0.0
      %26 = vst [vmem:[#allocation2 + $0x8] sm:$0xff] 0.0
    $region25: #{position_wise_feed_forward.1} parent=1 // pred_fallthru
      _
    %v27 = vld [vmem:[%s0] sm:$0xff]
    %v28 = vld [vmem:[%s0 + $0x8] sm:$0xff]
    %v29 = vld [vmem:[%s1] sm:$0xff]
    %v30 = vld [vmem:[%s1 + $0x8] sm:$0xff]
    %v31 = vld [vmem:[%s1 + $0x10] sm:$0xff]
    %v32 = vld [vmem:[%s1 + $0x18] sm:$0xff]
    %v33 = vld [vmem:[%s1 + $0x20] sm:$0xff]
    %v34 = vld [vmem:[%s1 + $0x28] sm:$0xff]
    %v35 = vld [vmem:[%s1 + $0x30] sm:$0xff]
    %v36 = vld [vmem:[%s1 + $0x38] sm:$0xff]
    %v37 = vld [vmem:[%s1 + $0x40] sm:$0xff]
    %v38 = vld [vmem:[%s1 + $0x48] sm:$0xff]
    %v39 = vld [vmem:[%s1 + $0x50] sm:$0xff]
    %v40 = vld [vmem:[%s1 + $0x58] sm:$0xff]
    %v41 = vld [vmem:[%s1 + $0x60] sm:$0xff]
    %v42 = vld [vmem:[%s1 + $0x68] sm:$0xff]
    %v43 = vld [vmem:[%s1 + $0x70] sm:$0xff]
    %v44 = vld [vmem:[%s1 + $0x78] sm:$0xff]
    %v45 = vld [vmem:[%s1 + $0x80] sm:$0xff]
    %v46 = vld [vmem:[%s1 + $0x88] sm:$0xff]
    %v47 = vld [vmem:[%s1 + $0x90] sm:$0xff]
    %v48 = vld [vmem:[%s1 + $0x98] sm:$0xff]
    %v49 = vld [vmem:[%s1 + $0xa0] sm:$0xff]
    %v50 = vld [vmem:[%s1 + $0xa8] sm:$0xff]
    %v51 = vld [vmem:[%s1 + $0xb0] sm:$0xff]
    %v52 = vld [vmem:[%s1 + $0xb8] sm:$0xff]
    %v53 = vld [vmem:[%s1 + $0xc0] sm:$0xff]
    %v54 = vld [vmem:[%s1 + $0xc8] sm:$0xff]
    %v55 = vld [vmem:[%s1 + $0xd0] sm:$0xff]
    %v56 = vld [vmem:[%s1 + $0xd8] sm:$0xff]
    %v57 = vld [vmem:[%s1 + $0xe0] sm:$0xff]
    %v58 = vld [vmem:[%s1 + $0xe8] sm:$0xff]
    %v59 = vld [vmem:[%s1 + $0xf0] sm:$0xff]
    %v60 = vld [vmem:[%s1 + $0xf8] sm:$0xff]
    %v61 = vld [vmem:[%s2] sm:$0x3]
    %v63 = vperm.slane %v61, 0
    %v64 = vperm.slane %v61, 1
    %67 = vmatpush.msra.mxu0 %v59
    %68 = vmatpush.msra.mxu0 %v57
    %69 = vmatpush.msra.mxu0 %v55
    %70 = vmatpush.msra.mxu0 %v53
    %71 = vmatpush.msra.mxu0 %v51
    %72 = vmatpush.msra.mxu0 %v49
    %73 = vmatpush.msra.mxu0 %v47
    %74 = vmatpush.msra.mxu0 %v45
    %75 = vmatpush.msra.mxu0 %v43
    %76 = vmatpush.msra.mxu0 %v41
    %77 = vmatpush.msra.mxu0 %v39
    %78 = vmatpush.msra.mxu0 %v37
    %79 = vmatpush.msra.mxu0 %v35
    %80 = vmatpush.msra.mxu0 %v33
    %81 = vmatpush.msra.mxu0 %v31
    %82 = vmatpush.msra.mxu0 %v29
    %83 = vmatmul.f32.gmra.mxu0 %v27
    %v84 = vpop.f32.mrf.mxu0
    %v85 = vadd.f32 %v63, %v84
    %86 = vmatmul.f32.gmra.mxu0 %v28
    %v87 = vpop.f32.mrf.mxu0
    %v88 = vadd.f32 %v63, %v87
    %89 = vdwg.mxu0
    %90 = vmatpush.msra.mxu0 %v60
    %91 = vmatpush.msra.mxu0 %v58
    %92 = vmatpush.msra.mxu0 %v56
    %93 = vmatpush.msra.mxu0 %v54
    %94 = vmatpush.msra.mxu0 %v52
    %95 = vmatpush.msra.mxu0 %v50
    %96 = vmatpush.msra.mxu0 %v48
    %97 = vmatpush.msra.mxu0 %v46
    %98 = vmatpush.msra.mxu0 %v44
    %99 = vmatpush.msra.mxu0 %v42
    %100 = vmatpush.msra.mxu0 %v40
    %101 = vmatpush.msra.mxu0 %v38
    %102 = vmatpush.msra.mxu0 %v36
    %103 = vmatpush.msra.mxu0 %v34
    %104 = vmatpush.msra.mxu0 %v32
    %105 = vmatpush.msra.mxu0 %v30
    %106 = vmatmul.f32.gmra.mxu0 %v27
    %v107 = vpop.f32.mrf.mxu0
    %v108 = vadd.f32 %v64, %v107
    %109 = vmatmul.f32.gmra.mxu0 %v28
    %v110 = vpop.f32.mrf.mxu0
    %v111 = vadd.f32 %v64, %v110
    %112 = vdwg.mxu0
    %v113 = vmax.f32 %v85, 0.0
    %v114 = vmax.f32 %v108, 0.0
    %v115 = vmax.f32 %v88, 0.0
    %v116 = vmax.f32 %v111, 0.0
    %v117 = vld [vmem:[#allocation2] sm:$0xff]
    %v118 = vld [vmem:[#allocation2 + $0x8] sm:$0xff]
    %v119 = vld [vmem:[%s3] sm:$0xff]
    %v120 = vld [vmem:[%s3 + $0x8] sm:$0xff]
    %v121 = vld [vmem:[%s3 + $0x10] sm:$0xff]
    %v122 = vld [vmem:[%s3 + $0x18] sm:$0xff]
    %v123 = vld [vmem:[%s3 + $0x20] sm:$0xff]
    %v124 = vld [vmem:[%s3 + $0x28] sm:$0xff]
    %v125 = vld [vmem:[%s3 + $0x30] sm:$0xff]
    %v126 = vld [vmem:[%s3 + $0x38] sm:$0xff]
    %v127 = vld [vmem:[%s3 + $0x40] sm:$0xff]
    %v128 = vld [vmem:[%s3 + $0x48] sm:$0xff]
    %v129 = vld [vmem:[%s3 + $0x50] sm:$0xff]
    %v130 = vld [vmem:[%s3 + $0x58] sm:$0xff]
    %v131 = vld [vmem:[%s3 + $0x60] sm:$0xff]
    %v132 = vld [vmem:[%s3 + $0x68] sm:$0xff]
    %v133 = vld [vmem:[%s3 + $0x70] sm:$0xff]
    %v134 = vld [vmem:[%s3 + $0x78] sm:$0xff]
    %v135 = vld [vmem:[%s3 + $0x80] sm:$0xff]
    %v136 = vld [vmem:[%s3 + $0x88] sm:$0xff]
    %v137 = vld [vmem:[%s3 + $0x90] sm:$0xff]
    %v138 = vld [vmem:[%s3 + $0x98] sm:$0xff]
    %v139 = vld [vmem:[%s3 + $0xa0] sm:$0xff]
    %v140 = vld [vmem:[%s3 + $0xa8] sm:$0xff]
    %v141 = vld [vmem:[%s3 + $0xb0] sm:$0xff]
    %v142 = vld [vmem:[%s3 + $0xb8] sm:$0xff]
    %v143 = vld [vmem:[%s3 + $0xc0] sm:$0xff]
    %v144 = vld [vmem:[%s3 + $0xc8] sm:$0xff]
    %v145 = vld [vmem:[%s3 + $0xd0] sm:$0xff]
    %v146 = vld [vmem:[%s3 + $0xd8] sm:$0xff]
    %v147 = vld [vmem:[%s3 + $0xe0] sm:$0xff]
    %v148 = vld [vmem:[%s3 + $0xe8] sm:$0xff]
    %v149 = vld [vmem:[%s3 + $0xf0] sm:$0xff]
    %v150 = vld [vmem:[%s3 + $0xf8] sm:$0xff]
    %151 = vmatpush.msra.mxu0 %v134
    %152 = vmatpush.msra.mxu0 %v133
    %153 = vmatpush.msra.mxu0 %v132
    %154 = vmatpush.msra.mxu0 %v131
    %155 = vmatpush.msra.mxu0 %v130
    %156 = vmatpush.msra.mxu0 %v129
    %157 = vmatpush.msra.mxu0 %v128
    %158 = vmatpush.msra.mxu0 %v127
    %159 = vmatpush.msra.mxu0 %v126
    %160 = vmatpush.msra.mxu0 %v125
    %161 = vmatpush.msra.mxu0 %v124
    %162 = vmatpush.msra.mxu0 %v123
    %163 = vmatpush.msra.mxu0 %v122
    %164 = vmatpush.msra.mxu0 %v121
    %165 = vmatpush.msra.mxu0 %v120
    %166 = vmatpush.msra.mxu0 %v119
    %167 = vmatmul.f32.gmra.mxu0 %v113
    %v168 = vpop.f32.mrf.mxu0
    %v169 = vadd.f32 0.0, %v168
    %170 = vmatmul.f32.gmra.mxu0 %v115
    %v171 = vpop.f32.mrf.mxu0
    %v172 = vadd.f32 0.0, %v171
    %173 = vdwg.mxu0
    %174 = vmatpush.msra.mxu0 %v150
    %175 = vmatpush.msra.mxu0 %v149
    %176 = vmatpush.msra.mxu0 %v148
    %177 = vmatpush.msra.mxu0 %v147
    %178 = vmatpush.msra.mxu0 %v146
    %179 = vmatpush.msra.mxu0 %v145
    %180 = vmatpush.msra.mxu0 %v144
    %181 = vmatpush.msra.mxu0 %v143
    %182 = vmatpush.msra.mxu0 %v142
    %183 = vmatpush.msra.mxu0 %v141
    %184 = vmatpush.msra.mxu0 %v140
    %185 = vmatpush.msra.mxu0 %v139
    %186 = vmatpush.msra.mxu0 %v138
    %187 = vmatpush.msra.mxu0 %v137
    %188 = vmatpush.msra.mxu0 %v136
    %189 = vmatpush.msra.mxu0 %v135
    %190 = vmatmul.f32.gmra.mxu0 %v114
    %v191 = vpop.f32.mrf.mxu0
    %v192 = vadd.f32 %v169, %v191
    %193 = vmatmul.f32.gmra.mxu0 %v116
    %v194 = vpop.f32.mrf.mxu0
    %v195 = vadd.f32 %v172, %v194
    %196 = vdwg.mxu0
    %v197 = vadd.f32 %v117, %v192
    %v198 = vadd.f32 %v118, %v195
    %199 = vst [vmem:[#allocation2] sm:$0xff] %v197
    %200 = vst [vmem:[#allocation2 + $0x8] sm:$0xff] %v198
    // Predicated region
    $region26: #{position_wise_feed_forward.1} parent=1 // pred_check
      %p201 = pneg %p21
    $region27: #{position_wise_feed_forward.1} parent=1 // pred_check_branch
      %203 = sbr.rel (%p201) target = $region29
    $region28: #{position_wise_feed_forward.1} parent=1 // pred_region
      %v204 = vld [vmem:[#allocation2] sm:$0xff]
      %v205 = vld [vmem:[#allocation2 + $0x8] sm:$0xff]
      %v206 = vld [vmem:[%s4] sm:$0x1]
      %v208 = vperm.slane %v206, 0
      %v210 = vadd.f32 %v204, %v208
      %v211 = vadd.f32 %v205, %v208
      %212 = vst [vmem:[#allocation3] sm:$0xff] %v210
      %213 = vst [vmem:[#allocation3 + $0x8] sm:$0xff] %v211
    $region29: #{position_wise_feed_forward.1} parent=1 // pred_fallthru
      _
    // Predicated region
    $region30: #{position_wise_feed_forward.1} parent=1 // pred_check
      _
    $region31: #{position_wise_feed_forward.1} parent=1 // pred_check_branch
      %215 = sbr.rel (0) target = $region33
    $region32: #{position_wise_feed_forward.1} parent=1 // pred_region
      %217 = vsyncadd [#allocation4], 0
      %s218 = sshll.u32 [#allocation3], 4
      %s219 = int_to_ptr.vmem [resolvable:$true] %s218
      %s220 = sshll.u32 %s5, 4
      %s221 = int_to_ptr.hbm [resolvable:$true] %s220
      %226 = dma.vmem_to_hbm [thread:$0]  %s219, 256, %s221, [#allocation4], 128, 128, 8
    $region33: #{position_wise_feed_forward.1} parent=1 // pred_fallthru
      _
    // Predicated region
    $region34: #{position_wise_feed_forward.1} parent=1 // pred_check
      _
    $region35: #{position_wise_feed_forward.1} parent=1 // pred_check_branch
      %228 = sbr.rel (0) target = $region37
    $region36: #{position_wise_feed_forward.1} parent=1 // pred_region
      %230 = dma.done [#allocation4], 256
    $region37: #{position_wise_feed_forward.1} parent=1 // pred_fallthru
      _
    %231 = vsyncpa [#allocation4], 1

</llo_original>
